<compile_context>
chip_gen: v7x
topology: tpu7x:2x2x1
jax: 0.10.0
libtpu: 0.0.40
codegen_flags: <defaults>
</compile_context>

<pallas_src>
import jax
import jax.numpy as jnp
from jax.experimental import pallas as pl
from jax.experimental.pallas import tpu as pltpu


def _bilinear_matrix(in_n: int, out_n: int) -> jnp.ndarray:
    """Row-interpolation matrix R of shape (out_n, in_n) matching
    torch.nn.functional.interpolate(mode='bilinear', align_corners=False),
    i.e. torchvision F.resize semantics (half-pixel centers, no antialias)."""
    i = jnp.arange(out_n, dtype=jnp.float32)
    src = (i + 0.5) * (in_n / out_n) - 0.5
    i0 = jnp.floor(src)
    frac = src - i0
    i0c = jnp.clip(i0, 0, in_n - 1).astype(jnp.int32)
    i1c = jnp.clip(i0 + 1.0, 0, in_n - 1).astype(jnp.int32)
    cols = jnp.arange(in_n)[None, :]
    R = ((cols == i0c[:, None]).astype(jnp.float32) * (1.0 - frac)[:, None]
         + (cols == i1c[:, None]).astype(jnp.float32) * frac[:, None])
    return R


def _round_up(x: int, m: int) -> int:
    return (x + m - 1) // m * m


def _make_kernel(tn: int, h: int, oh: int):
    """Kernel over one block of TN planes folded onto the sublane axis."""
    def kernel(rh_ref, rwT_ref, x_ref, o_ref):
        # rh_ref:  (oh, H)      resident constant
        # rwT_ref: (W, ow)      resident constant
        # x_ref:   (TN*H, W)    TN planes stacked on sublanes
        # o_ref:   (TN*oh, ow)
        u = jnp.dot(x_ref[...], rwT_ref[...],
                    preferred_element_type=jnp.float32)        # (TN*H, ow) f32
        u = u.astype(rh_ref.dtype)   # keep bf16 operands on the bf16 path
        rh = rh_ref[...]
        for p in range(tn):          # unrolled; static, tile-aligned slices
            blk = jnp.dot(rh, u[p * h:(p + 1) * h, :],
                          preferred_element_type=jnp.float32)  # (oh, ow)
            o_ref[pl.ds(p * oh, oh), :] = blk.astype(o_ref.dtype)
    return kernel


def _pick_tile_planes(H, W, oh, ow, n_planes, dtype_bytes,
                      target_in_block_bytes=1 << 20, max_tn=64):
    """Choose TN (planes per grid step) and padded plane count Np.

    Preferences: no padding (TN divides N), grid >= 2 steps (both v7x TCs
    busy), blocks under an explicit VMEM budget, biggest block under a ~1 MB
    input-block target to amortise per-step overhead."""
    lane = 128

    def blk_bytes(tn):
        in_b = tn * H * _round_up(W, lane) * dtype_bytes      # lane-padded
        out_b = tn * oh * _round_up(ow, lane) * dtype_bytes
        return in_b, out_b

    try:
        vmem_cap = int(pltpu.get_tpu_info().vmem_capacity_bytes)
    except Exception:
        vmem_cap = 64 << 20          # v7x per-TensorCore lower bound
    budget = min(vmem_cap // 4, 16 << 20)   # fits default scoped limits

    def fits(tn):
        in_b, out_b = blk_bytes(tn)
        return 2 * (in_b + out_b) <= budget   # double-buffered in + out

    def aligned(tn):
        return (tn * H) % 8 == 0 and (tn * oh) % 8 == 0

    divisors = [d for d in range(1, n_planes + 1)
                if n_planes % d == 0 and d <= max_tn]
    cands = [d for d in divisors
             if fits(d) and (n_planes // d) >= 2 and aligned(d)]
    if not cands:
        cands = [d for d in divisors
                 if fits(d) and (aligned(d) or d == n_planes)]
    if cands:
        under = [d for d in cands if blk_bytes(d)[0] <= target_in_block_bytes]
        return (max(under) if under else min(cands)), n_planes

    # Rare fallback (e.g. odd N with H not a multiple of 8): pad planes.
    tn = 1
    while tn < max_tn and not (aligned(tn) and fits(tn)):
        tn += 1
    return tn, _round_up(n_planes, tn)


def resize_random_hflip_crop(x, size, output_size, do_hflip=True,
                             centre_crop=True, allow_bf16_compute=False):
    """x: (B, C, H, W) float array -> (B, C, oh, ow)."""
    B, C, H, W = x.shape
    new_h, new_w = size

    rh = _bilinear_matrix(H, new_h)          # (new_h, H)  -> resize rows
    rw = _bilinear_matrix(W, new_w)          # (new_w, W)  -> resize cols

    if do_hflip:
        # hflip after resize == reverse the output-width interpolation rows.
        # Must happen BEFORE the crop slice to match resize->flip->crop order.
        rw = rw[::-1]

    if centre_crop:
        oh, ow = output_size
        top = int(round((new_h - oh) / 2.0))     # torchvision center_crop
        left = int(round((new_w - ow) / 2.0))
        rh = rh[top:top + oh]
        rw = rw[left:left + ow]
    else:
        oh, ow = new_h, new_w

    out_dtype = x.dtype
    # bf16 inputs (or explicit opt-in for weak-f32-MXU chips like v5e) keep
    # bf16 operands into the MXU with f32 accumulation; everything else f32.
    if x.dtype == jnp.bfloat16 or allow_bf16_compute:
        op_dtype = jnp.bfloat16
    else:
        op_dtype = jnp.float32

    N = B * C
    dtype_bytes = jnp.dtype(op_dtype).itemsize
    TN, Np = _pick_tile_planes(H, W, oh, ow, N, dtype_bytes)
    grid = Np // TN

    # Zero-copy sublane fold: (B,C,H,W) -> (N*H, W).  Upcast non-f32/bf16
    # dtypes explicitly so the MXU never sees a mixed-precision dot.
    x_in = x.astype(op_dtype)
    if Np != N:
        # TODO(synk): ragged tail handled by padding in the rare fallback path.
        x_in = jnp.pad(x_in.reshape(N, H, W), ((0, Np - N), (0, 0), (0, 0)))
    x_sub = x_in.reshape(Np * H, W)

    rh_d = jnp.asarray(rh, op_dtype)                          # (oh, H)
    rwT_d = jnp.asarray(rw, jnp.float32).T.astype(op_dtype)   # (W, ow), host transpose

    in_b = TN * H * _round_up(W, 128) * dtype_bytes
    out_b = TN * oh * _round_up(ow, 128) * dtype_bytes
    vmem_limit = int(min(32 << 20, max(4 << 20, 4 * (in_b + out_b) + (2 << 20))))

    out_sub = pl.pallas_call(
        _make_kernel(TN, H, oh),
        out_shape=jax.ShapeDtypeStruct((Np * oh, ow), out_dtype),
        grid_spec=pltpu.PrefetchScalarGridSpec(
            num_scalar_prefetch=0,
            grid=(grid,),
            in_specs=[
                pl.BlockSpec((oh, H), lambda g: (0, 0)),        # Rh  (resident)
                pl.BlockSpec((W, ow), lambda g: (0, 0)),        # RwT (resident)
                pl.BlockSpec((TN * H, W), lambda g: (g, 0)),    # TN planes
            ],
            out_specs=pl.BlockSpec((TN * oh, ow), lambda g: (g, 0)),
        ),
        compiler_params=pltpu.CompilerParams(
            dimension_semantics=("parallel",),
            vmem_limit_bytes=vmem_limit),
    )(rh_d, rwT_d, x_sub)

    # Zero-copy unfold on the common (unpadded) path.
    out = out_sub[:N * oh] if Np != N else out_sub
    return out.reshape(B, C, oh, ow)


if __name__ == "__main__":
    key = jax.random.PRNGKey(0)
    B, C, H, W = 2, 4, 16, 16
    size = (24, 24)          # self.size  (resize target)
    output_size = (16, 16)   # self.output_size (centre-crop target)

    x = jax.random.normal(key, (B, C, H, W), dtype=jnp.float32)

    out = resize_random_hflip_crop(x, size, output_size,
                                   do_hflip=True, centre_crop=True)
    out = jax.block_until_ready(out)
    assert out.shape == (B, C, output_size[0], output_size[1]), out.shape

    # Pure-JAX reference of the fused matmul path (same matrices) for sanity.
    rh = _bilinear_matrix(H, size[0])
    rw = _bilinear_matrix(W, size[1])[::-1]
    top = int(round((size[0] - output_size[0]) / 2.0))
    left = int(round((size[1] - output_size[1]) / 2.0))
    rh = rh[top:top + output_size[0]]
    rw = rw[left:left + output_size[1]]
    ref = jnp.einsum('ph,bchw,qw->bcpq', rh, x, rw)
    assert jnp.allclose(out, ref, atol=1e-5, rtol=1e-5)

    print("KERNEL_OK")
</pallas_src>

<mosaic_0001>
module attributes {stable_mosaic.version = 11 : i64} {
  func.func @kernel(%arg0: i32, %arg1: memref<16x16xf32, #tpu.memory_space<vmem>>, %arg2: memref<16x16xf32, #tpu.memory_space<vmem>>, %arg3: memref<64x16xf32, #tpu.memory_space<vmem>>, %arg4: memref<64x16xf32, #tpu.memory_space<vmem>>) attributes {dimension_semantics = [#tpu.dimension_semantics<parallel>], iteration_bounds = array<i64: 2>, scalar_prefetch = 0 : i64, scratch_operands = 0 : i64, tpu.core_type = #tpu.core_type<tc>, window_params = [{pipeline_mode = #tpu.pipeline_mode<synchronous>, transform_indices = @transform_0, window_bounds = array<i64: 16, 16>}, {pipeline_mode = #tpu.pipeline_mode<synchronous>, transform_indices = @transform_1, window_bounds = array<i64: 16, 16>}, {transform_indices = @transform_2, window_bounds = array<i64: 64, 16>}, {transform_indices = @transform_3, window_bounds = array<i64: 64, 16>}]} {
    %c0 = arith.constant 0 : index
    %c0_0 = arith.constant 0 : index
    %0 = vector.load %arg3[%c0, %c0_0] : memref<64x16xf32, #tpu.memory_space<vmem>>, vector<64x16xf32>
    %c0_1 = arith.constant 0 : index
    %c0_2 = arith.constant 0 : index
    %1 = vector.load %arg2[%c0_1, %c0_2] : memref<16x16xf32, #tpu.memory_space<vmem>>, vector<16x16xf32>
    %cst = arith.constant dense<0.000000e+00> : vector<64x16xf32>
    %2 = tpu.matmul %0, %1, %cst {dimension_numbers = #tpu.dot_dimension_numbers<[1], [0], [0], [1], [0, 0, 1, 1], [], []>} : vector<64x16xf32>, vector<16x16xf32>, vector<64x16xf32> -> vector<64x16xf32>
    %c0_3 = arith.constant 0 : index
    %c0_4 = arith.constant 0 : index
    %3 = vector.load %arg1[%c0_3, %c0_4] : memref<16x16xf32, #tpu.memory_space<vmem>>, vector<16x16xf32>
    %4 = vector.extract_strided_slice %2 {offsets = [0, 0], sizes = [16, 16], strides = [1, 1]} : vector<64x16xf32> to vector<16x16xf32>
    %cst_5 = arith.constant dense<0.000000e+00> : vector<16x16xf32>
    %5 = tpu.matmul %3, %4, %cst_5 {dimension_numbers = #tpu.dot_dimension_numbers<[1], [0], [0], [1], [0, 0, 1, 1], [], []>} : vector<16x16xf32>, vector<16x16xf32>, vector<16x16xf32> -> vector<16x16xf32>
    %c0_6 = arith.constant 0 : index
    %c0_7 = arith.constant 0 : index
    %6 = vector.load %arg4[%c0_6, %c0_7] : memref<64x16xf32, #tpu.memory_space<vmem>>, vector<16x16xf32>
    tpu.vector_store %arg4[%c0_6, %c0_7], %5 {strides = array<i32>} : memref<64x16xf32, #tpu.memory_space<vmem>>, vector<16x16xf32>,
    %7 = vector.extract_strided_slice %2 {offsets = [16, 0], sizes = [16, 16], strides = [1, 1]} : vector<64x16xf32> to vector<16x16xf32>
    %cst_8 = arith.constant dense<0.000000e+00> : vector<16x16xf32>
    %8 = tpu.matmul %3, %7, %cst_8 {dimension_numbers = #tpu.dot_dimension_numbers<[1], [0], [0], [1], [0, 0, 1, 1], [], []>} : vector<16x16xf32>, vector<16x16xf32>, vector<16x16xf32> -> vector<16x16xf32>
    %c16 = arith.constant 16 : index
    %c0_9 = arith.constant 0 : index
    %9 = vector.load %arg4[%c16, %c0_9] : memref<64x16xf32, #tpu.memory_space<vmem>>, vector<16x16xf32>
    tpu.vector_store %arg4[%c16, %c0_9], %8 {strides = array<i32>} : memref<64x16xf32, #tpu.memory_space<vmem>>, vector<16x16xf32>,
    %10 = vector.extract_strided_slice %2 {offsets = [32, 0], sizes = [16, 16], strides = [1, 1]} : vector<64x16xf32> to vector<16x16xf32>
    %cst_10 = arith.constant dense<0.000000e+00> : vector<16x16xf32>
    %11 = tpu.matmul %3, %10, %cst_10 {dimension_numbers = #tpu.dot_dimension_numbers<[1], [0], [0], [1], [0, 0, 1, 1], [], []>} : vector<16x16xf32>, vector<16x16xf32>, vector<16x16xf32> -> vector<16x16xf32>
    %c32 = arith.constant 32 : index
    %c0_11 = arith.constant 0 : index
    %12 = vector.load %arg4[%c32, %c0_11] : memref<64x16xf32, #tpu.memory_space<vmem>>, vector<16x16xf32>
    tpu.vector_store %arg4[%c32, %c0_11], %11 {strides = array<i32>} : memref<64x16xf32, #tpu.memory_space<vmem>>, vector<16x16xf32>,
    %13 = vector.extract_strided_slice %2 {offsets = [48, 0], sizes = [16, 16], strides = [1, 1]} : vector<64x16xf32> to vector<16x16xf32>
    %cst_12 = arith.constant dense<0.000000e+00> : vector<16x16xf32>
    %14 = tpu.matmul %3, %13, %cst_12 {dimension_numbers = #tpu.dot_dimension_numbers<[1], [0], [0], [1], [0, 0, 1, 1], [], []>} : vector<16x16xf32>, vector<16x16xf32>, vector<16x16xf32> -> vector<16x16xf32>
    %c48 = arith.constant 48 : index
    %c0_13 = arith.constant 0 : index
    %15 = vector.load %arg4[%c48, %c0_13] : memref<64x16xf32, #tpu.memory_space<vmem>>, vector<16x16xf32>
    tpu.vector_store %arg4[%c48, %c0_13], %14 {strides = array<i32>} : memref<64x16xf32, #tpu.memory_space<vmem>>, vector<16x16xf32>,
    return
  }
  func.func @transform_0(%arg0: i32) -> (i32, i32) {
    %c0_i32 = arith.constant 0 : i32
    %c0_i32_0 = arith.constant 0 : i32
    %c0_i32_1 = arith.constant 0 : i32
    return %c0_i32, %c0_i32_0 : i32, i32
  }
  func.func @transform_1(%arg0: i32) -> (i32, i32) {
    %c0_i32 = arith.constant 0 : i32
    %c0_i32_0 = arith.constant 0 : i32
    %c0_i32_1 = arith.constant 0 : i32
    return %c0_i32, %c0_i32_0 : i32, i32
  }
  func.func @transform_2(%arg0: i32) -> (i32, i32) {
    %c0_i32 = arith.constant 0 : i32
    %c0_i32_0 = arith.constant 0 : i32
    return %arg0, %c0_i32 : i32, i32
  }
  func.func @transform_3(%arg0: i32) -> (i32, i32) {
    %c0_i32 = arith.constant 0 : i32
    %c0_i32_0 = arith.constant 0 : i32
    return %arg0, %c0_i32 : i32, i32
  }
}

</mosaic_0001>

<llo_original>
// kernel: tpu_custom_call.1
$region0: #{tpu_custom_call.1}
  #allocation0 [shape = 'u32[]', space=smem, size = 0x4, offset = 0x4, fixed_abs, tag = 'smem constant byte address 0x4 - core index']
  #allocation1 [shape = 'u32[144,128]{1,0:T(1,128)}', space=vmem, size = 0x12000, scoped, tag = 'internal scratch']
  %s0 = inlined_call_operand.vmem [shape: f32[16,16], index: 0, kind: input, shape index: {}]
  %s1 = inlined_call_operand.vmem [shape: f32[16,16], index: 1, kind: input, shape index: {}]
  %s2 = inlined_call_operand.vmem [shape: f32[128,16], index: 2, kind: input, shape index: {}]
  %s3 = inlined_call_operand.vmem [shape: f32[128,16], index: 3, kind: output, shape index: {}]
  %s4 = sld [smem:[#allocation0]]
  $region45: #{tpu_custom_call.1} parent=0
    _
  %s6 = ssub.s32 1, %s4
  %s7 = scalar_select 0, %s6, %s4
  loop: start=0, step=1, limit=4
  $region2: #{tpu_custom_call.1} parent=0 // loop_pre_header
    _
  $region3: #{tpu_custom_call.1} parent=0 // loop_header
    %s9 = sphi 0, %s13
    %p10 = scmp.ge.s32.totalorder %s9, 4
    %s17 = sphi 0, %s17
    %s19 = sphi 0, %s17
    %s20 = sphi 0, %s19
    %s34 = sphi 0, %s20
    %s38 = sphi 0, %s38
    %s40 = sphi 0, %s38
    %s41 = sphi 0, %s40
    %s55 = sphi 0, %s41
    %s61 = sphi 0, %s63
    %s64 = sphi 0, %s61
    %s65 = sphi 0, %s64
    %s81 = sphi 0, %s65
    %s87 = sphi 0, %s89
    %s90 = sphi 0, %s87
    %s91 = sphi 0, %s90
    %s107 = sphi 0, %s91
  $region4: #{tpu_custom_call.1} parent=0 // loop_header_branch
    %12 = sbr.rel (%p10) target = $region8
  $region5: #{tpu_custom_call.1} parent=0 // loop_body
    %s14 = ssub.s32 %s9, 1
    %s15 = ssub.s32 %s9, 2
    %s16 = sadd.s32 %s9, 1
    %s18 = sadd.s32 %s17, 1
    %p21 = scmp.eq.s32.totalorder %s9, 1
    %p22 = scmp.ne.s32.totalorder %s17, %s19
    %p23 = scmp.eq.s32.totalorder %s9, 0
    %p24 = por %p22, %p23
    %p25 = scmp.ne.s32.totalorder %s17, %s19
    %p26 = scmp.eq.s32.totalorder %s14, 1
    %p27 = por %p25, %p26
    %p28 = scmp.ne.s32.totalorder %s19, %s20
    %p29 = scmp.eq.s32.totalorder %s14, 0
    %p30 = por %p28, %p29
    %p31 = scmp.ne.s32.totalorder %s19, %s20
    %p32 = scmp.eq.s32.totalorder %s15, 1
    %p33 = por %p31, %p32
    %p35 = scmp.ne.s32.totalorder %s20, %s34
    %p36 = scmp.eq.s32.totalorder %s15, 0
    %p37 = por %p35, %p36
    %s39 = sadd.s32 %s38, 1
    %p42 = scmp.eq.s32.totalorder %s9, 1
    %p43 = scmp.ne.s32.totalorder %s38, %s40
    %p44 = scmp.eq.s32.totalorder %s9, 0
    %p45 = por %p43, %p44
    %p46 = scmp.ne.s32.totalorder %s38, %s40
    %p47 = scmp.eq.s32.totalorder %s14, 1
    %p48 = por %p46, %p47
    %p49 = scmp.ne.s32.totalorder %s40, %s41
    %p50 = scmp.eq.s32.totalorder %s14, 0
    %p51 = por %p49, %p50
    %p52 = scmp.ne.s32.totalorder %s40, %s41
    %p53 = scmp.eq.s32.totalorder %s15, 1
    %p54 = por %p52, %p53
    %p56 = scmp.ne.s32.totalorder %s41, %s55
    %p57 = scmp.eq.s32.totalorder %s15, 0
    %p58 = por %p56, %p57
    %s59 = ssub.s32 %s9, %s16
    %p60 = scmp.eq.s32.totalorder %s59, 0
    %s62 = sadd.s32 %s61, 1
    %s63 = scalar_select %p60, %s61, %s62
    %p66 = pneg %p60
    %p67 = scmp.eq.s32.totalorder %s9, 1
    %p68 = por %p66, %p67
    %p69 = scmp.ne.s32.totalorder %s61, %s64
    %p70 = scmp.eq.s32.totalorder %s9, 0
    %p71 = por %p69, %p70
    %p72 = scmp.ne.s32.totalorder %s61, %s64
    %p73 = scmp.eq.s32.totalorder %s14, 1
    %p74 = por %p72, %p73
    %p75 = scmp.ne.s32.totalorder %s64, %s65
    %p76 = scmp.eq.s32.totalorder %s14, 0
    %p77 = por %p75, %p76
    %p78 = scmp.ne.s32.totalorder %s64, %s65
    %p79 = scmp.eq.s32.totalorder %s15, 1
    %p80 = por %p78, %p79
    %p82 = scmp.ne.s32.totalorder %s65, %s81
    %p83 = scmp.eq.s32.totalorder %s15, 0
    %p84 = por %p82, %p83
    %s85 = ssub.s32 %s9, %s16
    %p86 = scmp.eq.s32.totalorder %s85, 0
    %s88 = sadd.s32 %s87, 1
    %s89 = scalar_select %p86, %s87, %s88
    %p92 = pneg %p86
    %p93 = scmp.eq.s32.totalorder %s9, 1
    %p94 = por %p92, %p93
    %p95 = scmp.ne.s32.totalorder %s87, %s90
    %p96 = scmp.eq.s32.totalorder %s9, 0
    %p97 = por %p95, %p96
    %p98 = scmp.ne.s32.totalorder %s87, %s90
    %p99 = scmp.eq.s32.totalorder %s14, 1
    %p100 = por %p98, %p99
    %p101 = scmp.ne.s32.totalorder %s90, %s91
    %p102 = scmp.eq.s32.totalorder %s14, 0
    %p103 = por %p101, %p102
    %p104 = scmp.ne.s32.totalorder %s90, %s91
    %p105 = scmp.eq.s32.totalorder %s15, 1
    %p106 = por %p104, %p105
    %p108 = scmp.ne.s32.totalorder %s91, %s107
    %p109 = scmp.eq.s32.totalorder %s15, 0
    %p110 = por %p108, %p109
    %p111 = scmp.le.s32.totalorder 1, %s9
    %p112 = scmp.lt.s32.totalorder %s9, 3
    %p113 = pnand %p111, %p112
    %p114 = pneg %p113
    // Predicated region
    $region9: #{tpu_custom_call.1} parent=5 // pred_check
      _
    $region10: #{tpu_custom_call.1} parent=5 // pred_check_branch
      %116 = sbr.rel (%p113) target = $region12
    $region11: #{tpu_custom_call.1} parent=5 // pred_region
      %s117 = ssub.s32 %s9, 1
      // Predicated region
      $region13: #{tpu_custom_call.1} parent=11 // pred_check
        %p118 = pneg %p30
      $region14: #{tpu_custom_call.1} parent=11 // pred_check_branch
        %120 = sbr.rel (%p118) target = $region16
      $region15: #{tpu_custom_call.1} parent=11 // pred_region
        _
      $region16: #{tpu_custom_call.1} parent=11 // pred_fallthru
        _
      // Predicated region
      $region17: #{tpu_custom_call.1} parent=11 // pred_check
        %p121 = pneg %p51
      $region18: #{tpu_custom_call.1} parent=11 // pred_check_branch
        %123 = sbr.rel (%p121) target = $region20
      $region19: #{tpu_custom_call.1} parent=11 // pred_region
        _
      $region20: #{tpu_custom_call.1} parent=11 // pred_fallthru
        _
    $region12: #{tpu_custom_call.1} parent=5 // pred_fallthru
      _
    %p124 = scmp.lt.s32.totalorder %s9, 2
    // Predicated region
    $region21: #{tpu_custom_call.1} parent=5 // pred_check
      %p125 = pneg %p124
    $region22: #{tpu_custom_call.1} parent=5 // pred_check_branch
      %127 = sbr.rel (%p125) target = $region24
    $region23: #{tpu_custom_call.1} parent=5 // pred_region
      // Predicated region
      $region25: #{tpu_custom_call.1} parent=23 // pred_check
        %p128 = pneg %p71
      $region26: #{tpu_custom_call.1} parent=23 // pred_check_branch
        %130 = sbr.rel (%p128) target = $region28
      $region27: #{tpu_custom_call.1} parent=23 // pred_region
        %s131 = smul.u32 8, %s9
        %p132 = scmp.lt.s32.totalorder %s131, 15
        %s133 = scalar_select %p132, %s131, 15
        %s134 = smul.addr %s133, 8
        %s135 = scalar_lea.vmem %s2, %s134
        %s136 = smul.u32 8, %s9
      $region28: #{tpu_custom_call.1} parent=23 // pred_fallthru
        _
    $region24: #{tpu_custom_call.1} parent=5 // pred_fallthru
      _
    %p137 = scmp.le.s32.totalorder 1, %s9
    %p138 = scmp.lt.s32.totalorder %s9, 3
    %p139 = pnand %p137, %p138
    %p140 = pneg %p139
    // Predicated region
    $region29: #{tpu_custom_call.1} parent=5 // pred_check
      _
    $region30: #{tpu_custom_call.1} parent=5 // pred_check_branch
      %142 = sbr.rel (%p139) target = $region32
    $region31: #{tpu_custom_call.1} parent=5 // pred_region
      %s143 = ssub.s32 %s9, 1
      %p144 = pneg %p30
      %p145 = pneg %p27
      %p146 = pneg %p51
      %p147 = pneg %p48
      %s148 = smul.u32 8, %s14
      %p149 = scmp.lt.s32.totalorder %s148, 15
      %s150 = scalar_select %p149, %s148, 15
      %s151 = smul.addr %s150, 8
      %s152 = scalar_lea.vmem %s2, %s151
      %p153 = pneg %p77
      %p154 = pneg %p74
      %p155 = pneg %p103
      %p156 = pneg %p100
      %s157 = smul.u32 8, %s14
      %p158 = scmp.lt.s32.totalorder %s157, 15
      %s159 = scalar_select %p158, %s157, 15
      %s160 = smul.addr %s159, 8
      %s161 = scalar_lea.vmem %s3, %s160
      %s162 = smul.u32 8, %s14
      %p163 = scmp.lt.s32.totalorder %s162, 15
      %s164 = scalar_select %p163, %s162, 15
      %s165 = smul.addr %s164, 8
      %s166 = scalar_lea.vmem %s2, %s165
      %s167 = smul.u32 8, %s14
      %s168 = smul.u32 8, %s14
      %p169 = scmp.lt.s32.totalorder %s168, 15
      %s170 = scalar_select %p169, %s168, 15
      %s171 = smul.addr %s170, 8
      %s172 = scalar_lea.vmem %s3, %s171
      %s173 = smul.u32 8, %s14
      %v174 = vld [vmem:[%s166] sm:$0xff]
      %v175 = vld [vmem:[%s166 + $0x8] sm:$0xff]
      %v176 = vld [vmem:[%s166 + $0x10] sm:$0xff]
      %v177 = vld [vmem:[%s166 + $0x18] sm:$0xff]
      %v178 = vld [vmem:[%s166 + $0x20] sm:$0xff]
      %v179 = vld [vmem:[%s166 + $0x28] sm:$0xff]
      %v180 = vld [vmem:[%s166 + $0x30] sm:$0xff]
      %v181 = vld [vmem:[%s166 + $0x38] sm:$0xff]
      %v182 = vld [vmem:[%s1] sm:$0xff]
      %v183 = vld [vmem:[%s1 + $0x8] sm:$0xff]
      %vm184 = vcmask 130048
      %v186 = vsel %vm184, %v174, 0
      %v189 = vsel %vm184, %v175, 0
      %v192 = vsel %vm184, %v176, 0
      %v195 = vsel %vm184, %v177, 0
      %v198 = vsel %vm184, %v178, 0
      %v201 = vsel %vm184, %v179, 0
      %v204 = vsel %vm184, %v180, 0
      %v207 = vsel %vm184, %v181, 0
      %209 = vmatprep.subr.mxu0 0.0
      %210 = vmatpush1.msra.mxu0 %v182
      %211 = vmatprep.subr.mxu0 0.0
      %212 = vmatpush1.msra.mxu0 %v183
      %213 = vmatprep.subr.mxu0 0.0
      %214 = vmatpush1.msra.mxu0 0.0
      %215 = vmatprep.subr.mxu0 0.0
      %216 = vmatpush1.msra.mxu0 0.0
      %217 = vmatprep.subr.mxu0 0.0
      %218 = vmatpush1.msra.mxu0 0.0
      %219 = vmatprep.subr.mxu0 0.0
      %220 = vmatpush1.msra.mxu0 0.0
      %221 = vmatprep.subr.mxu0 0.0
      %222 = vmatpush1.msra.mxu0 0.0
      %223 = vmatprep.subr.mxu0 0.0
      %224 = vmatpush1.msra.mxu0 0.0
      %225 = vmatprep.subr.mxu0 0.0
      %226 = vmatpush1.msra.mxu0 0.0
      %227 = vmatprep.subr.mxu0 0.0
      %228 = vmatpush1.msra.mxu0 0.0
      %229 = vmatprep.subr.mxu0 0.0
      %230 = vmatpush1.msra.mxu0 0.0
      %231 = vmatprep.subr.mxu0 0.0
      %232 = vmatpush1.msra.mxu0 0.0
      %233 = vmatprep.subr.mxu0 0.0
      %234 = vmatpush1.msra.mxu0 0.0
      %235 = vmatprep.subr.mxu0 0.0
      %236 = vmatpush1.msra.mxu0 0.0
      %237 = vmatprep.subr.mxu0 0.0
      %238 = vmatpush1.msra.mxu0 0.0
      %239 = vmatprep.subr.mxu0 0.0
      %240 = vmatpush1.msra.mxu0 0.0
      %241 = vmatprep.subr.mxu0 0.0
      %242 = vmatpush1.msra.mxu0 0.0
      %243 = vmatprep.subr.mxu0 0.0
      %244 = vmatpush1.msra.mxu0 0.0
      %245 = vmatprep.subr.mxu0 0.0
      %246 = vmatpush1.msra.mxu0 0.0
      %247 = vmatprep.subr.mxu0 0.0
      %248 = vmatpush1.msra.mxu0 0.0
      %249 = vmatprep.subr.mxu0 0.0
      %250 = vmatpush1.msra.mxu0 0.0
      %251 = vmatprep.subr.mxu0 0.0
      %252 = vmatpush1.msra.mxu0 0.0
      %253 = vmatprep.subr.mxu0 0.0
      %254 = vmatpush1.msra.mxu0 0.0
      %255 = vmatprep.subr.mxu0 0.0
      %256 = vmatpush1.msra.mxu0 0.0
      %257 = vmatprep.subr.mxu0 0.0
      %258 = vmatpush1.msra.mxu0 0.0
      %259 = vmatprep.subr.mxu0 0.0
      %260 = vmatpush1.msra.mxu0 0.0
      %261 = vmatprep.subr.mxu0 0.0
      %262 = vmatpush1.msra.mxu0 0.0
      %263 = vmatprep.subr.mxu0 0.0
      %264 = vmatpush1.msra.mxu0 0.0
      %265 = vmatprep.subr.mxu0 0.0
      %266 = vmatpush1.msra.mxu0 0.0
      %267 = vmatprep.subr.mxu0 0.0
      %268 = vmatpush1.msra.mxu0 0.0
      %269 = vmatprep.subr.mxu0 0.0
      %270 = vmatpush1.msra.mxu0 0.0
      %271 = vmatprep.subr.mxu0 0.0
      %272 = vmatpush1.msra.mxu0 0.0
      %273 = vmatprep.mubr.f32.mxu0 0.0
      %274 = vmatmul.mubr.f32.gmra.mrb[0].mxu0 %v186
      %v275 = vpop.f32.mrb[0].mxu0
      %v276 = vadd.f32 0.0, %v275
      %v277 = vpop.f32.mrb[0].mxu0
      %278 = vmatprep.mubr.f32.mxu0 0.0
      %279 = vmatmul.mubr.f32.gmra.mrb[0].mxu0 %v189
      %v280 = vpop.f32.mrb[0].mxu0
      %v281 = vadd.f32 0.0, %v280
      %v282 = vpop.f32.mrb[0].mxu0
      %283 = vmatprep.mubr.f32.mxu0 0.0
      %284 = vmatmul.mubr.f32.gmra.mrb[0].mxu0 %v192
      %v285 = vpop.f32.mrb[0].mxu0
      %v286 = vadd.f32 0.0, %v285
      %v287 = vpop.f32.mrb[0].mxu0
      %288 = vmatprep.mubr.f32.mxu0 0.0
      %289 = vmatmul.mubr.f32.gmra.mrb[0].mxu0 %v195
      %v290 = vpop.f32.mrb[0].mxu0
      %v291 = vadd.f32 0.0, %v290
      %v292 = vpop.f32.mrb[0].mxu0
      %293 = vmatprep.mubr.f32.mxu0 0.0
      %294 = vmatmul.mubr.f32.gmra.mrb[0].mxu0 %v198
      %v295 = vpop.f32.mrb[0].mxu0
      %v296 = vadd.f32 0.0, %v295
      %v297 = vpop.f32.mrb[0].mxu0
      %298 = vmatprep.mubr.f32.mxu0 0.0
      %299 = vmatmul.mubr.f32.gmra.mrb[0].mxu0 %v201
      %v300 = vpop.f32.mrb[0].mxu0
      %v301 = vadd.f32 0.0, %v300
      %v302 = vpop.f32.mrb[0].mxu0
      %303 = vmatprep.mubr.f32.mxu0 0.0
      %304 = vmatmul.mubr.f32.gmra.mrb[0].mxu0 %v204
      %v305 = vpop.f32.mrb[0].mxu0
      %v306 = vadd.f32 0.0, %v305
      %v307 = vpop.f32.mrb[0].mxu0
      %308 = vmatprep.mubr.f32.mxu0 0.0
      %309 = vmatmul.mubr.f32.gmra.mrb[0].mxu0 %v207
      %v310 = vpop.f32.mrb[0].mxu0
      %v311 = vadd.f32 0.0, %v310
      %v312 = vpop.f32.mrb[0].mxu0
      %313 = vdwg.mxu0
      %v314 = vld [vmem:[%s0] sm:$0xff]
      %v315 = vld [vmem:[%s0 + $0x8] sm:$0xff]
      %v317 = vsel %vm184, %v314, 0
      %v320 = vsel %vm184, %v315, 0
      %322 = vmatprep.subr.mxu0 0.0
      %323 = vmatpush1.msra.mxu0 %v276
      %324 = vmatprep.subr.mxu0 0.0
      %325 = vmatpush1.msra.mxu0 %v281
      %326 = vmatprep.subr.mxu0 0.0
      %327 = vmatpush1.msra.mxu0 0.0
      %328 = vmatprep.subr.mxu0 0.0
      %329 = vmatpush1.msra.mxu0 0.0
      %330 = vmatprep.subr.mxu0 0.0
      %331 = vmatpush1.msra.mxu0 0.0
      %332 = vmatprep.subr.mxu0 0.0
      %333 = vmatpush1.msra.mxu0 0.0
      %334 = vmatprep.subr.mxu0 0.0
      %335 = vmatpush1.msra.mxu0 0.0
      %336 = vmatprep.subr.mxu0 0.0
      %337 = vmatpush1.msra.mxu0 0.0
      %338 = vmatprep.subr.mxu0 0.0
      %339 = vmatpush1.msra.mxu0 0.0
      %340 = vmatprep.subr.mxu0 0.0
      %341 = vmatpush1.msra.mxu0 0.0
      %342 = vmatprep.subr.mxu0 0.0
      %343 = vmatpush1.msra.mxu0 0.0
      %344 = vmatprep.subr.mxu0 0.0
      %345 = vmatpush1.msra.mxu0 0.0
      %346 = vmatprep.subr.mxu0 0.0
      %347 = vmatpush1.msra.mxu0 0.0
      %348 = vmatprep.subr.mxu0 0.0
      %349 = vmatpush1.msra.mxu0 0.0
      %350 = vmatprep.subr.mxu0 0.0
      %351 = vmatpush1.msra.mxu0 0.0
      %352 = vmatprep.subr.mxu0 0.0
      %353 = vmatpush1.msra.mxu0 0.0
      %354 = vmatprep.subr.mxu0 0.0
      %355 = vmatpush1.msra.mxu0 0.0
      %356 = vmatprep.subr.mxu0 0.0
      %357 = vmatpush1.msra.mxu0 0.0
      %358 = vmatprep.subr.mxu0 0.0
      %359 = vmatpush1.msra.mxu0 0.0
      %360 = vmatprep.subr.mxu0 0.0
      %361 = vmatpush1.msra.mxu0 0.0
      %362 = vmatprep.subr.mxu0 0.0
      %363 = vmatpush1.msra.mxu0 0.0
      %364 = vmatprep.subr.mxu0 0.0
      %365 = vmatpush1.msra.mxu0 0.0
      %366 = vmatprep.subr.mxu0 0.0
      %367 = vmatpush1.msra.mxu0 0.0
      %368 = vmatprep.subr.mxu0 0.0
      %369 = vmatpush1.msra.mxu0 0.0
      %370 = vmatprep.subr.mxu0 0.0
      %371 = vmatpush1.msra.mxu0 0.0
      %372 = vmatprep.subr.mxu0 0.0
      %373 = vmatpush1.msra.mxu0 0.0
      %374 = vmatprep.subr.mxu0 0.0
      %375 = vmatpush1.msra.mxu0 0.0
      %376 = vmatprep.subr.mxu0 0.0
      %377 = vmatpush1.msra.mxu0 0.0
      %378 = vmatprep.subr.mxu0 0.0
      %379 = vmatpush1.msra.mxu0 0.0
      %380 = vmatprep.subr.mxu0 0.0
      %381 = vmatpush1.msra.mxu0 0.0
      %382 = vmatprep.subr.mxu0 0.0
      %383 = vmatpush1.msra.mxu0 0.0
      %384 = vmatprep.subr.mxu0 0.0
      %385 = vmatpush1.msra.mxu0 0.0
      %386 = vmatprep.mubr.f32.mxu0 0.0
      %387 = vmatmul.mubr.f32.gmra.mrb[0].mxu0 %v317
      %v388 = vpop.f32.mrb[0].mxu0
      %v389 = vadd.f32 0.0, %v388
      %v390 = vpop.f32.mrb[0].mxu0
      %391 = vmatprep.mubr.f32.mxu0 0.0
      %392 = vmatmul.mubr.f32.gmra.mrb[0].mxu0 %v320
      %v393 = vpop.f32.mrb[0].mxu0
      %v394 = vadd.f32 0.0, %v393
      %v395 = vpop.f32.mrb[0].mxu0
      %396 = vdwg.mxu0
      %397 = vst.msk [vmem:[%s172] sm:$0xff] %vm184, %v389
      %398 = vst.msk [vmem:[%s172 + $0x8] sm:$0xff] %vm184, %v394
      %399 = vmatprep.subr.mxu0 0.0
      %400 = vmatpush1.msra.mxu0 %v286
      %401 = vmatprep.subr.mxu0 0.0
      %402 = vmatpush1.msra.mxu0 %v291
      %403 = vmatprep.subr.mxu0 0.0
      %404 = vmatpush1.msra.mxu0 0.0
      %405 = vmatprep.subr.mxu0 0.0
      %406 = vmatpush1.msra.mxu0 0.0
      %407 = vmatprep.subr.mxu0 0.0
      %408 = vmatpush1.msra.mxu0 0.0
      %409 = vmatprep.subr.mxu0 0.0
      %410 = vmatpush1.msra.mxu0 0.0
      %411 = vmatprep.subr.mxu0 0.0
      %412 = vmatpush1.msra.mxu0 0.0
      %413 = vmatprep.subr.mxu0 0.0
      %414 = vmatpush1.msra.mxu0 0.0
      %415 = vmatprep.subr.mxu0 0.0
      %416 = vmatpush1.msra.mxu0 0.0
      %417 = vmatprep.subr.mxu0 0.0
      %418 = vmatpush1.msra.mxu0 0.0
      %419 = vmatprep.subr.mxu0 0.0
      %420 = vmatpush1.msra.mxu0 0.0
      %421 = vmatprep.subr.mxu0 0.0
      %422 = vmatpush1.msra.mxu0 0.0
      %423 = vmatprep.subr.mxu0 0.0
      %424 = vmatpush1.msra.mxu0 0.0
      %425 = vmatprep.subr.mxu0 0.0
      %426 = vmatpush1.msra.mxu0 0.0
      %427 = vmatprep.subr.mxu0 0.0
      %428 = vmatpush1.msra.mxu0 0.0
      %429 = vmatprep.subr.mxu0 0.0
      %430 = vmatpush1.msra.mxu0 0.0
      %431 = vmatprep.subr.mxu0 0.0
      %432 = vmatpush1.msra.mxu0 0.0
      %433 = vmatprep.subr.mxu0 0.0
      %434 = vmatpush1.msra.mxu0 0.0
      %435 = vmatprep.subr.mxu0 0.0
      %436 = vmatpush1.msra.mxu0 0.0
      %437 = vmatprep.subr.mxu0 0.0
      %438 = vmatpush1.msra.mxu0 0.0
      %439 = vmatprep.subr.mxu0 0.0
      %440 = vmatpush1.msra.mxu0 0.0
      %441 = vmatprep.subr.mxu0 0.0
      %442 = vmatpush1.msra.mxu0 0.0
      %443 = vmatprep.subr.mxu0 0.0
      %444 = vmatpush1.msra.mxu0 0.0
      %445 = vmatprep.subr.mxu0 0.0
      %446 = vmatpush1.msra.mxu0 0.0
      %447 = vmatprep.subr.mxu0 0.0
      %448 = vmatpush1.msra.mxu0 0.0
      %449 = vmatprep.subr.mxu0 0.0
      %450 = vmatpush1.msra.mxu0 0.0
      %451 = vmatprep.subr.mxu0 0.0
      %452 = vmatpush1.msra.mxu0 0.0
      %453 = vmatprep.subr.mxu0 0.0
      %454 = vmatpush1.msra.mxu0 0.0
      %455 = vmatprep.subr.mxu0 0.0
      %456 = vmatpush1.msra.mxu0 0.0
      %457 = vmatprep.subr.mxu0 0.0
      %458 = vmatpush1.msra.mxu0 0.0
      %459 = vmatprep.subr.mxu0 0.0
      %460 = vmatpush1.msra.mxu0 0.0
      %461 = vmatprep.subr.mxu0 0.0
      %462 = vmatpush1.msra.mxu0 0.0
      %463 = vmatprep.mubr.f32.mxu0 0.0
      %464 = vmatmul.mubr.f32.gmra.mrb[0].mxu0 %v317
      %v465 = vpop.f32.mrb[0].mxu0
      %v466 = vadd.f32 0.0, %v465
      %v467 = vpop.f32.mrb[0].mxu0
      %468 = vmatprep.mubr.f32.mxu0 0.0
      %469 = vmatmul.mubr.f32.gmra.mrb[0].mxu0 %v320
      %v470 = vpop.f32.mrb[0].mxu0
      %v471 = vadd.f32 0.0, %v470
      %v472 = vpop.f32.mrb[0].mxu0
      %473 = vdwg.mxu0
      %474 = vst.msk [vmem:[%s172 + $0x10] sm:$0xff] %vm184, %v466
      %475 = vst.msk [vmem:[%s172 + $0x18] sm:$0xff] %vm184, %v471
      %476 = vmatprep.subr.mxu0 0.0
      %477 = vmatpush1.msra.mxu0 %v296
      %478 = vmatprep.subr.mxu0 0.0
      %479 = vmatpush1.msra.mxu0 %v301
      %480 = vmatprep.subr.mxu0 0.0
      %481 = vmatpush1.msra.mxu0 0.0
      %482 = vmatprep.subr.mxu0 0.0
      %483 = vmatpush1.msra.mxu0 0.0
      %484 = vmatprep.subr.mxu0 0.0
      %485 = vmatpush1.msra.mxu0 0.0
      %486 = vmatprep.subr.mxu0 0.0
      %487 = vmatpush1.msra.mxu0 0.0
      %488 = vmatprep.subr.mxu0 0.0
      %489 = vmatpush1.msra.mxu0 0.0
      %490 = vmatprep.subr.mxu0 0.0
      %491 = vmatpush1.msra.mxu0 0.0
      %492 = vmatprep.subr.mxu0 0.0
      %493 = vmatpush1.msra.mxu0 0.0
      %494 = vmatprep.subr.mxu0 0.0
      %495 = vmatpush1.msra.mxu0 0.0
      %496 = vmatprep.subr.mxu0 0.0
      %497 = vmatpush1.msra.mxu0 0.0
      %498 = vmatprep.subr.mxu0 0.0
      %499 = vmatpush1.msra.mxu0 0.0
      %500 = vmatprep.subr.mxu0 0.0
      %501 = vmatpush1.msra.mxu0 0.0
      %502 = vmatprep.subr.mxu0 0.0
      %503 = vmatpush1.msra.mxu0 0.0
      %504 = vmatprep.subr.mxu0 0.0
      %505 = vmatpush1.msra.mxu0 0.0
      %506 = vmatprep.subr.mxu0 0.0
      %507 = vmatpush1.msra.mxu0 0.0
      %508 = vmatprep.subr.mxu0 0.0
      %509 = vmatpush1.msra.mxu0 0.0
      %510 = vmatprep.subr.mxu0 0.0
      %511 = vmatpush1.msra.mxu0 0.0
      %512 = vmatprep.subr.mxu0 0.0
      %513 = vmatpush1.msra.mxu0 0.0
      %514 = vmatprep.subr.mxu0 0.0
      %515 = vmatpush1.msra.mxu0 0.0
      %516 = vmatprep.subr.mxu0 0.0
      %517 = vmatpush1.msra.mxu0 0.0
      %518 = vmatprep.subr.mxu0 0.0
      %519 = vmatpush1.msra.mxu0 0.0
      %520 = vmatprep.subr.mxu0 0.0
      %521 = vmatpush1.msra.mxu0 0.0
      %522 = vmatprep.subr.mxu0 0.0
      %523 = vmatpush1.msra.mxu0 0.0
      %524 = vmatprep.subr.mxu0 0.0
      %525 = vmatpush1.msra.mxu0 0.0
      %526 = vmatprep.subr.mxu0 0.0
      %527 = vmatpush1.msra.mxu0 0.0
      %528 = vmatprep.subr.mxu0 0.0
      %529 = vmatpush1.msra.mxu0 0.0
      %530 = vmatprep.subr.mxu0 0.0
      %531 = vmatpush1.msra.mxu0 0.0
      %532 = vmatprep.subr.mxu0 0.0
      %533 = vmatpush1.msra.mxu0 0.0
      %534 = vmatprep.subr.mxu0 0.0
      %535 = vmatpush1.msra.mxu0 0.0
      %536 = vmatprep.subr.mxu0 0.0
      %537 = vmatpush1.msra.mxu0 0.0
      %538 = vmatprep.subr.mxu0 0.0
      %539 = vmatpush1.msra.mxu0 0.0
      %540 = vmatprep.mubr.f32.mxu0 0.0
      %541 = vmatmul.mubr.f32.gmra.mrb[0].mxu0 %v317
      %v542 = vpop.f32.mrb[0].mxu0
      %v543 = vadd.f32 0.0, %v542
      %v544 = vpop.f32.mrb[0].mxu0
      %545 = vmatprep.mubr.f32.mxu0 0.0
      %546 = vmatmul.mubr.f32.gmra.mrb[0].mxu0 %v320
      %v547 = vpop.f32.mrb[0].mxu0
      %v548 = vadd.f32 0.0, %v547
      %v549 = vpop.f32.mrb[0].mxu0
      %550 = vdwg.mxu0
      %551 = vst.msk [vmem:[%s172 + $0x20] sm:$0xff] %vm184, %v543
      %552 = vst.msk [vmem:[%s172 + $0x28] sm:$0xff] %vm184, %v548
      %553 = vmatprep.subr.mxu0 0.0
      %554 = vmatpush1.msra.mxu0 %v306
      %555 = vmatprep.subr.mxu0 0.0
      %556 = vmatpush1.msra.mxu0 %v311
      %557 = vmatprep.subr.mxu0 0.0
      %558 = vmatpush1.msra.mxu0 0.0
      %559 = vmatprep.subr.mxu0 0.0
      %560 = vmatpush1.msra.mxu0 0.0
      %561 = vmatprep.subr.mxu0 0.0
      %562 = vmatpush1.msra.mxu0 0.0
      %563 = vmatprep.subr.mxu0 0.0
      %564 = vmatpush1.msra.mxu0 0.0
      %565 = vmatprep.subr.mxu0 0.0
      %566 = vmatpush1.msra.mxu0 0.0
      %567 = vmatprep.subr.mxu0 0.0
      %568 = vmatpush1.msra.mxu0 0.0
      %569 = vmatprep.subr.mxu0 0.0
      %570 = vmatpush1.msra.mxu0 0.0
      %571 = vmatprep.subr.mxu0 0.0
      %572 = vmatpush1.msra.mxu0 0.0
      %573 = vmatprep.subr.mxu0 0.0
      %574 = vmatpush1.msra.mxu0 0.0
      %575 = vmatprep.subr.mxu0 0.0
      %576 = vmatpush1.msra.mxu0 0.0
      %577 = vmatprep.subr.mxu0 0.0
      %578 = vmatpush1.msra.mxu0 0.0
      %579 = vmatprep.subr.mxu0 0.0
      %580 = vmatpush1.msra.mxu0 0.0
      %581 = vmatprep.subr.mxu0 0.0
      %582 = vmatpush1.msra.mxu0 0.0
      %583 = vmatprep.subr.mxu0 0.0
      %584 = vmatpush1.msra.mxu0 0.0
      %585 = vmatprep.subr.mxu0 0.0
      %586 = vmatpush1.msra.mxu0 0.0
      %587 = vmatprep.subr.mxu0 0.0
      %588 = vmatpush1.msra.mxu0 0.0
      %589 = vmatprep.subr.mxu0 0.0
      %590 = vmatpush1.msra.mxu0 0.0
      %591 = vmatprep.subr.mxu0 0.0
      %592 = vmatpush1.msra.mxu0 0.0
      %593 = vmatprep.subr.mxu0 0.0
      %594 = vmatpush1.msra.mxu0 0.0
      %595 = vmatprep.subr.mxu0 0.0
      %596 = vmatpush1.msra.mxu0 0.0
      %597 = vmatprep.subr.mxu0 0.0
      %598 = vmatpush1.msra.mxu0 0.0
      %599 = vmatprep.subr.mxu0 0.0
      %600 = vmatpush1.msra.mxu0 0.0
      %601 = vmatprep.subr.mxu0 0.0
      %602 = vmatpush1.msra.mxu0 0.0
      %603 = vmatprep.subr.mxu0 0.0
      %604 = vmatpush1.msra.mxu0 0.0
      %605 = vmatprep.subr.mxu0 0.0
      %606 = vmatpush1.msra.mxu0 0.0
      %607 = vmatprep.subr.mxu0 0.0
      %608 = vmatpush1.msra.mxu0 0.0
      %609 = vmatprep.subr.mxu0 0.0
      %610 = vmatpush1.msra.mxu0 0.0
      %611 = vmatprep.subr.mxu0 0.0
      %612 = vmatpush1.msra.mxu0 0.0
      %613 = vmatprep.subr.mxu0 0.0
      %614 = vmatpush1.msra.mxu0 0.0
      %615 = vmatprep.subr.mxu0 0.0
      %616 = vmatpush1.msra.mxu0 0.0
      %617 = vmatprep.mubr.f32.mxu0 0.0
      %618 = vmatmul.mubr.f32.gmra.mrb[0].mxu0 %v317
      %v619 = vpop.f32.mrb[0].mxu0
      %v620 = vadd.f32 0.0, %v619
      %v621 = vpop.f32.mrb[0].mxu0
      %622 = vmatprep.mubr.f32.mxu0 0.0
      %623 = vmatmul.mubr.f32.gmra.mrb[0].mxu0 %v320
      %v624 = vpop.f32.mrb[0].mxu0
      %v625 = vadd.f32 0.0, %v624
      %v626 = vpop.f32.mrb[0].mxu0
      %627 = vdwg.mxu0
      %628 = vst.msk [vmem:[%s172 + $0x30] sm:$0xff] %vm184, %v620
      %629 = vst.msk [vmem:[%s172 + $0x38] sm:$0xff] %vm184, %v625
      %s630 = smul.u32 8, %s14
      %p631 = scmp.lt.s32.totalorder %s630, 15
      %s632 = scalar_select %p631, %s630, 15
      %s633 = smul.addr %s632, 8
      %s634 = scalar_lea.vmem %s3, %s633
      // Predicated region
      $region33: #{tpu_custom_call.1} parent=31 // pred_check
        %p635 = pneg %p100
      $region34: #{tpu_custom_call.1} parent=31 // pred_check_branch
        %637 = sbr.rel (%p635) target = $region36
      $region35: #{tpu_custom_call.1} parent=31 // pred_region
        %s638 = smul.u32 8, %s14
      $region36: #{tpu_custom_call.1} parent=31 // pred_fallthru
        _
    $region32: #{tpu_custom_call.1} parent=5 // pred_fallthru
      _
    %p639 = scmp.le.s32.totalorder 2, %s9
    // Predicated region
    $region37: #{tpu_custom_call.1} parent=5 // pred_check
      %p640 = pneg %p639
    $region38: #{tpu_custom_call.1} parent=5 // pred_check_branch
      %642 = sbr.rel (%p640) target = $region40
    $region39: #{tpu_custom_call.1} parent=5 // pred_region
      %s643 = ssub.s32 %s9, 2
      // Predicated region
      $region41: #{tpu_custom_call.1} parent=39 // pred_check
        %p644 = pneg %p106
      $region42: #{tpu_custom_call.1} parent=39 // pred_check_branch
        %646 = sbr.rel (%p644) target = $region44
      $region43: #{tpu_custom_call.1} parent=39 // pred_region
        %s647 = smul.u32 8, %s15
        %p648 = scmp.lt.s32.totalorder %s647, 15
        %s649 = scalar_select %p648, %s647, 15
        %s650 = smul.addr %s649, 8
        %s651 = scalar_lea.vmem %s3, %s650
      $region44: #{tpu_custom_call.1} parent=39 // pred_fallthru
        _
    $region40: #{tpu_custom_call.1} parent=5 // pred_fallthru
      _
  $region6: #{tpu_custom_call.1} parent=0 // loop_footer
    %s13 = sadd.s32 1, %s9
  $region7: #{tpu_custom_call.1} parent=0 // loop_footer_branch
    %8 = sbr.rel target = $region3
  $region8: #{tpu_custom_call.1} parent=0 // loop_exit
    _

</llo_original>
